<compile_context>
chip_gen: v7x
topology: tpu7x:2x2x1
jax: 0.10.0
libtpu: 0.0.40
codegen_flags: <defaults>
</compile_context>

<pallas_src>
import functools

import jax
import jax.numpy as jnp
from jax import lax
from jax.experimental import pallas as pl
from jax.experimental.pallas import tpu as pltpu


def _topology_fused_kernel(v_ref, ew0_ref, eb0_ref, ew1_ref, eb1_ref,
                           wa_ref, wbT_ref, cb0c_ref, cw1_ref, cb1_ref,
                           out_ref, pi_sc, pjT_sc, *, activate, valid_rows):
    it = pl.program_id(1)

    # ---------------- per-batch embed + classifier parts (it == 0) ----------
    @pl.when(it == 0)
    def _():
        x = v_ref[...]                                            # (NP_R, C)

        # association_embed_maker: Linear -> ReLU -> Linear, then sigmoid.
        h = jnp.maximum(
            jnp.dot(x, ew0_ref[...], preferred_element_type=jnp.float32)
            + eb0_ref[...], 0.0)                                  # (NP_R, C2)
        e = jax.nn.sigmoid(
            jnp.dot(h, ew1_ref[...], preferred_element_type=jnp.float32)
            + eb1_ref[...])                                       # (NP_R, C4)

        # concat([e_i, e_j]) @ W0 == e_i @ Wa + e_j @ Wb
        # part_i[m, c] = sum_k e[m, k] * Wa[k, c]
        pi_sc[...] = jnp.dot(e, wa_ref[...],
                             preferred_element_type=jnp.float32)  # (NP_R, C4)

        # part_jT stored lane-dense (row index on lanes) with the classifier
        # bias folded in:  pjT[c, m] = sum_k WbT[c, k] * e[m, k] + b0[c].
        # Produced directly by dot_general -> no in-kernel transpose needed.
        pjT = lax.dot_general(
            wbT_ref[...], e, (((1,), (1,)), ((), ())),
            preferred_element_type=jnp.float32) + cb0c_ref[...]   # (C4, NP_R)

        if valid_rows < pjT_sc.shape[1]:
            # Keep padded j-lanes finite/deterministic; they are sliced off
            # in the wrapper.
            pjT_sc[...] = jnp.zeros_like(pjT_sc)
            pjT_sc[:, :valid_rows] = pjT
        else:
            pjT_sc[...] = pjT

    # ---------------- pairwise classifier for this i-tile -------------------
    ti, np_c = out_ref.shape
    c4 = pi_sc.shape[1]

    row0 = pl.multiple_of(it * ti, ti)
    pi = pi_sc[pl.ds(row0, ti), :]                                # (TI, C4)
    pjT = pjT_sc[...]                                             # (C4, NP_C)

    sim = jnp.zeros((ti, np_c), jnp.float32)
    if c4 <= 32:
        # Short static unroll: lane-dense VPU add/relu/scalar-mul per hidden
        # channel; no (N, N, C/4) intermediate, no lane-width-1 matmul.
        for k in range(c4):
            term = jnp.maximum(pi[:, k:k + 1] + pjT[k:k + 1, :], 0.0)
            sim = sim + cw1_ref[k] * term
    else:
        def body(k, acc):
            col = lax.dynamic_slice_in_dim(pi, k, 1, axis=1)      # (TI, 1)
            row = lax.dynamic_slice_in_dim(pjT, k, 1, axis=0)     # (1, NP_C)
            return acc + cw1_ref[k] * jnp.maximum(col + row, 0.0)
        sim = lax.fori_loop(0, c4, body, sim, unroll=8)

    sim = sim + cb1_ref[0]
    if activate:
        sim = jax.nn.sigmoid(sim)
    out_ref[...] = sim


def topology_head_forward(vertex, params, activate=True):
    B, N, C = vertex.shape
    assert C % 4 == 0, "in_channels must be divisible by 4"
    C2, C4 = C // 2, C // 4
    ew0, eb0, ew1, eb1, cw0, cb0, cw1, cb1 = params

    # Host-side parameter prep (free): split classifier layer-0 into the e_i /
    # e_j halves, pre-transpose the e_j half, fold biases into handy shapes.
    wa = cw0[:C4, :]                          # (C4, C4)
    wbT = cw0[C4:, :].T                       # (C4, C4) for lane-dense part_jT
    cb0_col = cb0.reshape(C4, 1)              # (C4, 1) folded into part_jT
    cw1_vec = cw1.reshape(C4)                 # (C4,)  -> SMEM scalars
    cb1_vec = cb1.reshape(1)                  # (1,)   -> SMEM scalar

    # Rows (i axis): pad only to the f32 sublane granule (8).  Lanes (j axis):
    # pad to 128 so output stores are unmasked / lane-dense.
    NP_R = ((N + 7) // 8) * 8
    if NP_R <= 256:
        TI = NP_R
    else:
        TI = 128
        NP_R = ((NP_R + TI - 1) // TI) * TI
    n_it = NP_R // TI
    NP_C = ((N + 127) // 128) * 128

    v_pad = jnp.pad(vertex, ((0, 0), (0, NP_R - N), (0, 0)))

    kernel = functools.partial(_topology_fused_kernel,
                               activate=activate, valid_rows=NP_R)

    out = pl.pallas_call(
        kernel,
        out_shape=jax.ShapeDtypeStruct((B, NP_R, NP_C), jnp.float32),
        grid_spec=pltpu.PrefetchScalarGridSpec(
            num_scalar_prefetch=0,
            grid=(B, n_it),
            in_specs=[
                pl.BlockSpec((None, NP_R, C), lambda b, it: (b, 0, 0)),   # vertex
                pl.BlockSpec((C, C2), lambda b, it: (0, 0)),              # ew0
                pl.BlockSpec((1, C2), lambda b, it: (0, 0)),              # eb0
                pl.BlockSpec((C2, C4), lambda b, it: (0, 0)),             # ew1
                pl.BlockSpec((1, C4), lambda b, it: (0, 0)),              # eb1
                pl.BlockSpec((C4, C4), lambda b, it: (0, 0)),             # wa
                pl.BlockSpec((C4, C4), lambda b, it: (0, 0)),             # wbT
                pl.BlockSpec((C4, 1), lambda b, it: (0, 0)),              # cb0
                pl.BlockSpec(memory_space=pltpu.MemorySpace.SMEM),        # cw1
                pl.BlockSpec(memory_space=pltpu.MemorySpace.SMEM),        # cb1
            ],
            out_specs=pl.BlockSpec((None, TI, NP_C), lambda b, it: (b, it, 0)),
            scratch_shapes=[
                pltpu.VMEM((NP_R, C4), jnp.float32),   # part_i  (persists per b)
                pltpu.VMEM((C4, NP_C), jnp.float32),   # part_jT (persists per b)
            ],
        ),
        compiler_params=pltpu.CompilerParams(
            dimension_semantics=("parallel", "arbitrary")),
    )(v_pad, ew0, eb0, ew1, eb1, wa, wbT, cb0_col, cw1_vec, cb1_vec)

    return out[:, :N, :N]


def topology_head_reference(vertex, params, activate=True):
    """Pure-JAX reference mirroring the PyTorch module exactly."""
    ew0, eb0, ew1, eb1, cw0, cb0, cw1, cb1 = params
    h = jax.nn.relu(vertex @ ew0 + eb0[0])
    embed = jax.nn.sigmoid(h @ ew1 + eb1[0])                       # (B, N, C//4)
    N = embed.shape[1]
    f1 = jnp.repeat(embed[:, :, None, :], N, axis=2)               # (B, N, N, C//4)
    f2 = jnp.repeat(embed[:, None, :, :], N, axis=1)               # (B, N, N, C//4)
    feats = jnp.concatenate([f1, f2], axis=-1)                     # (B, N, N, C//2)
    h2 = jax.nn.relu(feats @ cw0 + cb0[0])
    sim = jnp.squeeze(h2 @ cw1 + cb1[0], axis=-1)                  # (B, N, N)
    if activate:
        sim = jax.nn.sigmoid(sim)
    return sim


def make_params(key, in_channels):
    C = in_channels
    C2, C4 = C // 2, C // 4
    ks = jax.random.split(key, 8)
    scale = 0.2
    ew0 = scale * jax.random.normal(ks[0], (C, C2), jnp.float32)
    eb0 = scale * jax.random.normal(ks[1], (1, C2), jnp.float32)
    ew1 = scale * jax.random.normal(ks[2], (C2, C4), jnp.float32)
    eb1 = scale * jax.random.normal(ks[3], (1, C4), jnp.float32)
    cw0 = scale * jax.random.normal(ks[4], (C2, C4), jnp.float32)
    cb0 = scale * jax.random.normal(ks[5], (1, C4), jnp.float32)
    cw1 = scale * jax.random.normal(ks[6], (C4, 1), jnp.float32)
    cb1 = scale * jax.random.normal(ks[7], (1, 1), jnp.float32)
    return (ew0, eb0, ew1, eb1, cw0, cb0, cw1, cb1)


if __name__ == "__main__":
    key = jax.random.PRNGKey(0)
    k_x, k_p = jax.random.split(key)

    B, N, C = 2, 8, 32  # batch, num_vertices, in_channels
    vertex = jax.random.normal(k_x, (B, N, C), jnp.float32)
    params = make_params(k_p, C)

    out = topology_head_forward(vertex, params, activate=True)
    out = jax.block_until_ready(out)

    ref = topology_head_reference(vertex, params, activate=True)
    assert out.shape == (B, N, N)
    assert jnp.allclose(out, ref, atol=1e-5, rtol=1e-5), (
        f"max abs err {jnp.max(jnp.abs(out - ref))}"
    )

    print("KERNEL_OK")
</pallas_src>

<mosaic_0001>
module attributes {stable_mosaic.version = 11 : i64} {
  func.func @_topology_fused_kernel(%arg0: i32, %arg1: i32, %arg2: memref<1x8x32xf32, #tpu.memory_space<vmem>>, %arg3: memref<32x16xf32, #tpu.memory_space<vmem>>, %arg4: memref<1x16xf32, #tpu.memory_space<vmem>>, %arg5: memref<16x8xf32, #tpu.memory_space<vmem>>, %arg6: memref<1x8xf32, #tpu.memory_space<vmem>>, %arg7: memref<8x8xf32, #tpu.memory_space<vmem>>, %arg8: memref<8x8xf32, #tpu.memory_space<vmem>>, %arg9: memref<8x1xf32, #tpu.memory_space<vmem>>, %arg10: memref<8xf32, #tpu.memory_space<smem>>, %arg11: memref<1xf32, #tpu.memory_space<smem>>, %arg12: memref<1x8x128xf32, #tpu.memory_space<vmem>>, %arg13: memref<8x8xf32, #tpu.memory_space<vmem>>, %arg14: memref<8x128xf32, #tpu.memory_space<vmem>>) attributes {dimension_semantics = [#tpu.dimension_semantics<parallel>, #tpu.dimension_semantics<arbitrary>], iteration_bounds = array<i64: 2, 1>, scalar_prefetch = 0 : i64, scratch_operands = 2 : i64, tpu.core_type = #tpu.core_type<tc>, window_params = [{transform_indices = @transform_0, window_bounds = array<i64: 1, 8, 32>}, {pipeline_mode = #tpu.pipeline_mode<synchronous>, transform_indices = @transform_1, window_bounds = array<i64: 32, 16>}, {pipeline_mode = #tpu.pipeline_mode<synchronous>, transform_indices = @transform_2, window_bounds = array<i64: 1, 16>}, {pipeline_mode = #tpu.pipeline_mode<synchronous>, transform_indices = @transform_3, window_bounds = array<i64: 16, 8>}, {pipeline_mode = #tpu.pipeline_mode<synchronous>, transform_indices = @transform_4, window_bounds = array<i64: 1, 8>}, {pipeline_mode = #tpu.pipeline_mode<synchronous>, transform_indices = @transform_5, window_bounds = array<i64: 8, 8>}, {pipeline_mode = #tpu.pipeline_mode<synchronous>, transform_indices = @transform_6, window_bounds = array<i64: 8, 8>}, {pipeline_mode = #tpu.pipeline_mode<synchronous>, transform_indices = @transform_7, window_bounds = array<i64: 8, 1>}, {transform_indices = @transform_8, window_bounds = array<i64: 8>}, {transform_indices = @transform_9, window_bounds = array<i64: 1>}, {transform_indices = @transform_10, window_bounds = array<i64: 1, 8, 128>}]} {
    %c0_i32 = arith.constant 0 : i32
    %0 = arith.cmpi eq, %arg1, %c0_i32 : i32
    %1 = arith.extui %0 : i1 to i32
    %c0_i32_0 = arith.constant 0 : i32
    %2 = arith.cmpi ne, %1, %c0_i32_0 : i32
    scf.if %2 {
      %c0_17 = arith.constant 0 : index
      %c0_18 = arith.constant 0 : index
      %c0_19 = arith.constant 0 : index
      %108 = vector.load %arg2[%c0_17, %c0_18, %c0_19] : memref<1x8x32xf32, #tpu.memory_space<vmem>>, vector<1x8x32xf32>
      %109 = vector.shape_cast %108 : vector<1x8x32xf32> to vector<8x32xf32>
      %c0_20 = arith.constant 0 : index
      %c0_21 = arith.constant 0 : index
      %110 = vector.load %arg3[%c0_20, %c0_21] : memref<32x16xf32, #tpu.memory_space<vmem>>, vector<32x16xf32>
      %cst_22 = arith.constant dense<0.000000e+00> : vector<8x16xf32>
      %111 = tpu.matmul %109, %110, %cst_22 {dimension_numbers = #tpu.dot_dimension_numbers<[1], [0], [0], [1], [0, 0, 1, 1], [], []>} : vector<8x32xf32>, vector<32x16xf32>, vector<8x16xf32> -> vector<8x16xf32>
      %c0_23 = arith.constant 0 : index
      %c0_24 = arith.constant 0 : index
      %112 = vector.load %arg4[%c0_23, %c0_24] : memref<1x16xf32, #tpu.memory_space<vmem>>, vector<1x16xf32>
      %113 = vector.broadcast %112 : vector<1x16xf32> to vector<8x16xf32>
      %114 = arith.addf %111, %113 : vector<8x16xf32>
      %cst_25 = arith.constant 0.000000e+00 : f32
      %115 = vector.broadcast %cst_25 : f32 to vector<8x16xf32>
      %116 = arith.maximumf %114, %115 : vector<8x16xf32>
      %c0_26 = arith.constant 0 : index
      %c0_27 = arith.constant 0 : index
      %117 = vector.load %arg5[%c0_26, %c0_27] : memref<16x8xf32, #tpu.memory_space<vmem>>, vector<16x8xf32>
      %cst_28 = arith.constant dense<0.000000e+00> : vector<8x8xf32>
      %118 = tpu.matmul %116, %117, %cst_28 {dimension_numbers = #tpu.dot_dimension_numbers<[1], [0], [0], [1], [0, 0, 1, 1], [], []>} : vector<8x16xf32>, vector<16x8xf32>, vector<8x8xf32> -> vector<8x8xf32>
      %c0_29 = arith.constant 0 : index
      %c0_30 = arith.constant 0 : index
      %119 = vector.load %arg6[%c0_29, %c0_30] : memref<1x8xf32, #tpu.memory_space<vmem>>, vector<1x8xf32>
      %120 = vector.broadcast %119 : vector<1x8xf32> to vector<8x8xf32>
      %121 = arith.addf %118, %120 : vector<8x8xf32>
      %122 = arith.negf %121 : vector<8x8xf32>
      %123 = math.exp %122 : vector<8x8xf32>
      %cst_31 = arith.constant 1.000000e+00 : f32
      %124 = vector.broadcast %cst_31 : f32 to vector<8x8xf32>
      %125 = arith.addf %124, %123 : vector<8x8xf32>
      %126 = arith.divf %124, %125 : vector<8x8xf32>
      %c0_32 = arith.constant 0 : index
      %c0_33 = arith.constant 0 : index
      %127 = vector.load %arg7[%c0_32, %c0_33] : memref<8x8xf32, #tpu.memory_space<vmem>>, vector<8x8xf32>
      %cst_34 = arith.constant dense<0.000000e+00> : vector<8x8xf32>
      %128 = tpu.matmul %126, %127, %cst_34 {dimension_numbers = #tpu.dot_dimension_numbers<[1], [0], [0], [1], [0, 0, 1, 1], [], []>} : vector<8x8xf32>, vector<8x8xf32>, vector<8x8xf32> -> vector<8x8xf32>
      %c0_35 = arith.constant 0 : index
      %c0_36 = arith.constant 0 : index
      %129 = vector.load %arg13[%c0_35, %c0_36] : memref<8x8xf32, #tpu.memory_space<vmem>>, vector<8x8xf32>
      tpu.vector_store %arg13[%c0_35, %c0_36], %128 {strides = array<i32>} : memref<8x8xf32, #tpu.memory_space<vmem>>, vector<8x8xf32>,
      %c0_37 = arith.constant 0 : index
      %c0_38 = arith.constant 0 : index
      %130 = vector.load %arg8[%c0_37, %c0_38] : memref<8x8xf32, #tpu.memory_space<vmem>>, vector<8x8xf32>
      %cst_39 = arith.constant dense<0.000000e+00> : vector<8x8xf32>
      %131 = tpu.matmul %130, %126, %cst_39 {dimension_numbers = #tpu.dot_dimension_numbers<[1], [1], [0], [0], [0, 0, 1, 0], [], []>} : vector<8x8xf32>, vector<8x8xf32>, vector<8x8xf32> -> vector<8x8xf32>
      %c0_40 = arith.constant 0 : index
      %c0_41 = arith.constant 0 : index
      %132 = vector.load %arg9[%c0_40, %c0_41] : memref<8x1xf32, #tpu.memory_space<vmem>>, vector<8x1xf32>
      %133 = vector.broadcast %132 : vector<8x1xf32> to vector<8x8xf32>
      %134 = arith.addf %131, %133 : vector<8x8xf32>
      %cst_42 = arith.constant 0.000000e+00 : f32
      %135 = vector.broadcast %cst_42 : f32 to vector<8x128xf32>
      %c0_43 = arith.constant 0 : index
      %c0_44 = arith.constant 0 : index
      %136 = vector.load %arg14[%c0_43, %c0_44] : memref<8x128xf32, #tpu.memory_space<vmem>>, vector<8x128xf32>
      tpu.vector_store %arg14[%c0_43, %c0_44], %135 {strides = array<i32>} : memref<8x128xf32, #tpu.memory_space<vmem>>, vector<8x128xf32>,
      %c0_45 = arith.constant 0 : index
      %c0_46 = arith.constant 0 : index
      %137 = vector.load %arg14[%c0_45, %c0_46] : memref<8x128xf32, #tpu.memory_space<vmem>>, vector<8x8xf32>
      tpu.vector_store %arg14[%c0_45, %c0_46], %134 {strides = array<i32>} : memref<8x128xf32, #tpu.memory_space<vmem>>, vector<8x8xf32>,
    } else {
    }
    %c8_i32 = arith.constant 8 : i32
    %3 = arith.muli %arg1, %c8_i32 : i32
    %4 = tpu.assume_multiple %3, 8 : i32
    %5 = arith.index_cast %4 : i32 to index
    %c0 = arith.constant 0 : index
    %6 = vector.load %arg13[%5, %c0] : memref<8x8xf32, #tpu.memory_space<vmem>>, vector<8x8xf32>
    %c0_1 = arith.constant 0 : index
    %c0_2 = arith.constant 0 : index
    %7 = vector.load %arg14[%c0_1, %c0_2] : memref<8x128xf32, #tpu.memory_space<vmem>>, vector<8x128xf32>
    %cst = arith.constant 0.000000e+00 : f32
    %8 = vector.broadcast %cst : f32 to vector<8x128xf32>
    %9 = vector.extract_strided_slice %6 {offsets = [0, 0], sizes = [8, 1], strides = [1, 1]} : vector<8x8xf32> to vector<8x1xf32>
    %10 = vector.extract_strided_slice %7 {offsets = [0, 0], sizes = [1, 128], strides = [1, 1]} : vector<8x128xf32> to vector<1x128xf32>
    %11 = vector.broadcast %9 : vector<8x1xf32> to vector<8x128xf32>
    %12 = vector.broadcast %10 : vector<1x128xf32> to vector<8x128xf32>
    %13 = arith.addf %11, %12 : vector<8x128xf32>
    %cst_3 = arith.constant 0.000000e+00 : f32
    %14 = vector.broadcast %cst_3 : f32 to vector<8x128xf32>
    %15 = arith.maximumf %13, %14 : vector<8x128xf32>
    %c0_4 = arith.constant 0 : index
    %16 = memref.load %arg10[%c0_4] : memref<8xf32, #tpu.memory_space<smem>>
    %17 = vector.broadcast %16 : f32 to vector<8x128xf32>
    %18 = arith.mulf %17, %15 : vector<8x128xf32>
    %19 = arith.addf %8, %18 : vector<8x128xf32>
    %20 = vector.extract_strided_slice %6 {offsets = [0, 1], sizes = [8, 1], strides = [1, 1]} : vector<8x8xf32> to vector<8x1xf32>
    %21 = vector.extract_strided_slice %7 {offsets = [1, 0], sizes = [1, 128], strides = [1, 1]} : vector<8x128xf32> to vector<1x128xf32>
    %22 = vector.broadcast %20 : vector<8x1xf32> to vector<8x128xf32>
    %23 = vector.broadcast %21 : vector<1x128xf32> to vector<8x128xf32>
    %24 = arith.addf %22, %23 : vector<8x128xf32>
    %cst_5 = arith.constant 0.000000e+00 : f32
    %25 = vector.broadcast %cst_5 : f32 to vector<8x128xf32>
    %26 = arith.maximumf %24, %25 : vector<8x128xf32>
    %c1 = arith.constant 1 : index
    %27 = memref.load %arg10[%c1] : memref<8xf32, #tpu.memory_space<smem>>
    %28 = vector.broadcast %27 : f32 to vector<8x128xf32>
    %29 = arith.mulf %28, %26 : vector<8x128xf32>
    %30 = arith.addf %19, %29 : vector<8x128xf32>
    %31 = vector.extract_strided_slice %6 {offsets = [0, 2], sizes = [8, 1], strides = [1, 1]} : vector<8x8xf32> to vector<8x1xf32>
    %32 = vector.extract_strided_slice %7 {offsets = [2, 0], sizes = [1, 128], strides = [1, 1]} : vector<8x128xf32> to vector<1x128xf32>
    %33 = vector.broadcast %31 : vector<8x1xf32> to vector<8x128xf32>
    %34 = vector.broadcast %32 : vector<1x128xf32> to vector<8x128xf32>
    %35 = arith.addf %33, %34 : vector<8x128xf32>
    %cst_6 = arith.constant 0.000000e+00 : f32
    %36 = vector.broadcast %cst_6 : f32 to vector<8x128xf32>
    %37 = arith.maximumf %35, %36 : vector<8x128xf32>
    %c2 = arith.constant 2 : index
    %38 = memref.load %arg10[%c2] : memref<8xf32, #tpu.memory_space<smem>>
    %39 = vector.broadcast %38 : f32 to vector<8x128xf32>
    %40 = arith.mulf %39, %37 : vector<8x128xf32>
    %41 = arith.addf %30, %40 : vector<8x128xf32>
    %42 = vector.extract_strided_slice %6 {offsets = [0, 3], sizes = [8, 1], strides = [1, 1]} : vector<8x8xf32> to vector<8x1xf32>
    %43 = vector.extract_strided_slice %7 {offsets = [3, 0], sizes = [1, 128], strides = [1, 1]} : vector<8x128xf32> to vector<1x128xf32>
    %44 = vector.broadcast %42 : vector<8x1xf32> to vector<8x128xf32>
    %45 = vector.broadcast %43 : vector<1x128xf32> to vector<8x128xf32>
    %46 = arith.addf %44, %45 : vector<8x128xf32>
    %cst_7 = arith.constant 0.000000e+00 : f32
    %47 = vector.broadcast %cst_7 : f32 to vector<8x128xf32>
    %48 = arith.maximumf %46, %47 : vector<8x128xf32>
    %c3 = arith.constant 3 : index
    %49 = memref.load %arg10[%c3] : memref<8xf32, #tpu.memory_space<smem>>
    %50 = vector.broadcast %49 : f32 to vector<8x128xf32>
    %51 = arith.mulf %50, %48 : vector<8x128xf32>
    %52 = arith.addf %41, %51 : vector<8x128xf32>
    %53 = vector.extract_strided_slice %6 {offsets = [0, 4], sizes = [8, 1], strides = [1, 1]} : vector<8x8xf32> to vector<8x1xf32>
    %54 = vector.extract_strided_slice %7 {offsets = [4, 0], sizes = [1, 128], strides = [1, 1]} : vector<8x128xf32> to vector<1x128xf32>
    %55 = vector.broadcast %53 : vector<8x1xf32> to vector<8x128xf32>
    %56 = vector.broadcast %54 : vector<1x128xf32> to vector<8x128xf32>
    %57 = arith.addf %55, %56 : vector<8x128xf32>
    %cst_8 = arith.constant 0.000000e+00 : f32
    %58 = vector.broadcast %cst_8 : f32 to vector<8x128xf32>
    %59 = arith.maximumf %57, %58 : vector<8x128xf32>
    %c4 = arith.constant 4 : index
    %60 = memref.load %arg10[%c4] : memref<8xf32, #tpu.memory_space<smem>>
    %61 = vector.broadcast %60 : f32 to vector<8x128xf32>
    %62 = arith.mulf %61, %59 : vector<8x128xf32>
    %63 = arith.addf %52, %62 : vector<8x128xf32>
    %64 = vector.extract_strided_slice %6 {offsets = [0, 5], sizes = [8, 1], strides = [1, 1]} : vector<8x8xf32> to vector<8x1xf32>
    %65 = vector.extract_strided_slice %7 {offsets = [5, 0], sizes = [1, 128], strides = [1, 1]} : vector<8x128xf32> to vector<1x128xf32>
    %66 = vector.broadcast %64 : vector<8x1xf32> to vector<8x128xf32>
    %67 = vector.broadcast %65 : vector<1x128xf32> to vector<8x128xf32>
    %68 = arith.addf %66, %67 : vector<8x128xf32>
    %cst_9 = arith.constant 0.000000e+00 : f32
    %69 = vector.broadcast %cst_9 : f32 to vector<8x128xf32>
    %70 = arith.maximumf %68, %69 : vector<8x128xf32>
    %c5 = arith.constant 5 : index
    %71 = memref.load %arg10[%c5] : memref<8xf32, #tpu.memory_space<smem>>
    %72 = vector.broadcast %71 : f32 to vector<8x128xf32>
    %73 = arith.mulf %72, %70 : vector<8x128xf32>
    %74 = arith.addf %63, %73 : vector<8x128xf32>
    %75 = vector.extract_strided_slice %6 {offsets = [0, 6], sizes = [8, 1], strides = [1, 1]} : vector<8x8xf32> to vector<8x1xf32>
    %76 = vector.extract_strided_slice %7 {offsets = [6, 0], sizes = [1, 128], strides = [1, 1]} : vector<8x128xf32> to vector<1x128xf32>
    %77 = vector.broadcast %75 : vector<8x1xf32> to vector<8x128xf32>
    %78 = vector.broadcast %76 : vector<1x128xf32> to vector<8x128xf32>
    %79 = arith.addf %77, %78 : vector<8x128xf32>
    %cst_10 = arith.constant 0.000000e+00 : f32
    %80 = vector.broadcast %cst_10 : f32 to vector<8x128xf32>
    %81 = arith.maximumf %79, %80 : vector<8x128xf32>
    %c6 = arith.constant 6 : index
    %82 = memref.load %arg10[%c6] : memref<8xf32, #tpu.memory_space<smem>>
    %83 = vector.broadcast %82 : f32 to vector<8x128xf32>
    %84 = arith.mulf %83, %81 : vector<8x128xf32>
    %85 = arith.addf %74, %84 : vector<8x128xf32>
    %86 = vector.extract_strided_slice %6 {offsets = [0, 7], sizes = [8, 1], strides = [1, 1]} : vector<8x8xf32> to vector<8x1xf32>
    %87 = vector.extract_strided_slice %7 {offsets = [7, 0], sizes = [1, 128], strides = [1, 1]} : vector<8x128xf32> to vector<1x128xf32>
    %88 = vector.broadcast %86 : vector<8x1xf32> to vector<8x128xf32>
    %89 = vector.broadcast %87 : vector<1x128xf32> to vector<8x128xf32>
    %90 = arith.addf %88, %89 : vector<8x128xf32>
    %cst_11 = arith.constant 0.000000e+00 : f32
    %91 = vector.broadcast %cst_11 : f32 to vector<8x128xf32>
    %92 = arith.maximumf %90, %91 : vector<8x128xf32>
    %c7 = arith.constant 7 : index
    %93 = memref.load %arg10[%c7] : memref<8xf32, #tpu.memory_space<smem>>
    %94 = vector.broadcast %93 : f32 to vector<8x128xf32>
    %95 = arith.mulf %94, %92 : vector<8x128xf32>
    %96 = arith.addf %85, %95 : vector<8x128xf32>
    %c0_12 = arith.constant 0 : index
    %97 = memref.load %arg11[%c0_12] : memref<1xf32, #tpu.memory_space<smem>>
    %98 = vector.broadcast %97 : f32 to vector<8x128xf32>
    %99 = arith.addf %96, %98 : vector<8x128xf32>
    %100 = arith.negf %99 : vector<8x128xf32>
    %101 = math.exp %100 : vector<8x128xf32>
    %cst_13 = arith.constant 1.000000e+00 : f32
    %102 = vector.broadcast %cst_13 : f32 to vector<8x128xf32>
    %103 = arith.addf %102, %101 : vector<8x128xf32>
    %104 = arith.divf %102, %103 : vector<8x128xf32>
    %c0_14 = arith.constant 0 : index
    %c0_15 = arith.constant 0 : index
    %c0_16 = arith.constant 0 : index
    %105 = vector.load %arg12[%c0_14, %c0_15, %c0_16] : memref<1x8x128xf32, #tpu.memory_space<vmem>>, vector<1x8x128xf32>
    %106 = vector.shape_cast %105 : vector<1x8x128xf32> to vector<8x128xf32>
    %107 = vector.shape_cast %104 : vector<8x128xf32> to vector<1x8x128xf32>
    tpu.vector_store %arg12[%c0_14, %c0_15, %c0_16], %107 {strides = array<i32>} : memref<1x8x128xf32, #tpu.memory_space<vmem>>, vector<1x8x128xf32>,
    return
  }
  func.func @transform_0(%arg0: i32, %arg1: i32) -> (i32, i32, i32) {
    %c0_i32 = arith.constant 0 : i32
    %c0_i32_0 = arith.constant 0 : i32
    %c0_i32_1 = arith.constant 0 : i32
    return %arg0, %c0_i32, %c0_i32_0 : i32, i32, i32
  }
  func.func @transform_1(%arg0: i32, %arg1: i32) -> (i32, i32) {
    %c0_i32 = arith.constant 0 : i32
    %c0_i32_0 = arith.constant 0 : i32
    %c0_i32_1 = arith.constant 0 : i32
    return %c0_i32, %c0_i32_0 : i32, i32
  }
  func.func @transform_2(%arg0: i32, %arg1: i32) -> (i32, i32) {
    %c0_i32 = arith.constant 0 : i32
    %c0_i32_0 = arith.constant 0 : i32
    %c0_i32_1 = arith.constant 0 : i32
    return %c0_i32, %c0_i32_0 : i32, i32
  }
  func.func @transform_3(%arg0: i32, %arg1: i32) -> (i32, i32) {
    %c0_i32 = arith.constant 0 : i32
    %c0_i32_0 = arith.constant 0 : i32
    %c0_i32_1 = arith.constant 0 : i32
    return %c0_i32, %c0_i32_0 : i32, i32
  }
  func.func @transform_4(%arg0: i32, %arg1: i32) -> (i32, i32) {
    %c0_i32 = arith.constant 0 : i32
    %c0_i32_0 = arith.constant 0 : i32
    %c0_i32_1 = arith.constant 0 : i32
    return %c0_i32, %c0_i32_0 : i32, i32
  }
  func.func @transform_5(%arg0: i32, %arg1: i32) -> (i32, i32) {
    %c0_i32 = arith.constant 0 : i32
    %c0_i32_0 = arith.constant 0 : i32
    %c0_i32_1 = arith.constant 0 : i32
    return %c0_i32, %c0_i32_0 : i32, i32
  }
  func.func @transform_6(%arg0: i32, %arg1: i32) -> (i32, i32) {
    %c0_i32 = arith.constant 0 : i32
    %c0_i32_0 = arith.constant 0 : i32
    %c0_i32_1 = arith.constant 0 : i32
    return %c0_i32, %c0_i32_0 : i32, i32
  }
  func.func @transform_7(%arg0: i32, %arg1: i32) -> (i32, i32) {
    %c0_i32 = arith.constant 0 : i32
    %c0_i32_0 = arith.constant 0 : i32
    %c0_i32_1 = arith.constant 0 : i32
    return %c0_i32, %c0_i32_0 : i32, i32
  }
  func.func @transform_8(%arg0: i32, %arg1: i32) -> i32 {
    %c0_i32 = arith.constant 0 : i32
    %c0_i32_0 = arith.constant 0 : i32
    return %c0_i32 : i32
  }
  func.func @transform_9(%arg0: i32, %arg1: i32) -> i32 {
    %c0_i32 = arith.constant 0 : i32
    %c0_i32_0 = arith.constant 0 : i32
    return %c0_i32 : i32
  }
  func.func @transform_10(%arg0: i32, %arg1: i32) -> (i32, i32, i32) {
    %c0_i32 = arith.constant 0 : i32
    %c0_i32_0 = arith.constant 0 : i32
    return %arg0, %arg1, %c0_i32 : i32, i32, i32
  }
}

</mosaic_0001>

<llo_original>
// kernel: tpu_custom_call.1
$region0: #{tpu_custom_call.1}
  #allocation0 [shape = 'u32[]', space=smem, size = 0x4, offset = 0x4, fixed_abs, tag = 'smem constant byte address 0x4 - core index']
  #allocation1 [shape = 'u32[144,128]{1,0:T(1,128)}', space=vmem, size = 0x12000, scoped, tag = 'internal scratch']
  #allocation2 [shape = 'f32[8,8]{1,0:T(8,128)}', space=vmem, size = 0x1000, scoped, tag = 'scratch operand']
  #allocation3 [shape = 'f32[8,128]{1,0:T(8,128)}', space=vmem, size = 0x1000, scoped, tag = 'scratch operand']
  #allocation4 [shape = 'f32[1]{0:T(128)S(6)}', space=smem, size = 0x200, scoped, tag = 'scoped memory for tpu_custom_call.1']
  %s0 = inlined_call_operand.vmem [shape: f32[2,8,32], index: 0, kind: input, shape index: {}]
  %s1 = inlined_call_operand.vmem [shape: f32[32,16], index: 1, kind: input, shape index: {}]
  %s2 = inlined_call_operand.vmem [shape: f32[1,16], index: 2, kind: input, shape index: {}]
  %s3 = inlined_call_operand.vmem [shape: f32[16,8], index: 3, kind: input, shape index: {}]
  %s4 = inlined_call_operand.vmem [shape: f32[1,8], index: 4, kind: input, shape index: {}]
  %s5 = inlined_call_operand.vmem [shape: f32[8,8], index: 5, kind: input, shape index: {}]
  %s6 = inlined_call_operand.vmem [shape: f32[8,8], index: 6, kind: input, shape index: {}]
  %s7 = inlined_call_operand.vmem [shape: f32[8,1], index: 7, kind: input, shape index: {}]
  %s8 = inlined_call_operand.vmem [shape: f32[8], index: 8, kind: input, shape index: {}]
  %s9 = inlined_call_operand.<no memory space> [shape: f32[1], index: 9, kind: input, shape index: {}]
  %s10 = inlined_call_operand.hbm [shape: f32[2,8,128], index: 10, kind: output, shape index: {}]
  %s11 = sld [smem:[#allocation0]]
  $region81: #{tpu_custom_call.1} parent=0
    _
  %s13 = ssub.s32 1, %s11
  %s14 = scalar_select 0, %s13, %s11
  %15 = sst [smem:[#allocation4]] %s9
  $region1: #{tpu_custom_call.1} parent=0
    #allocation5 [shape = 'u8[512]{0}', space=smem, size = 0x200, scoped, tag = 'input window, operand 8, single buffered']
    #allocation6 [shape = 's32[2]{0}', space=sflag, size = 0x8, scoped, tag = 'scoped memory for tpu_custom_call.1']
    #allocation7 [shape = 's32[2]{0}', space=sflag, size = 0x8, scoped, tag = 'scoped memory for tpu_custom_call.1']
    #allocation8 [shape = 'u8[8192]{0}', space=vmem, size = 0x2000, scoped, tag = 'output window, operand 0']
    %16 = vsyncpa [#allocation7], 0
    %17 = vsyncpa [#allocation6], 0
    %s18 = scalar_lea.sflag [#allocation6], 1
    %19 = vsyncpa %s18, 0
    loop: start=0, step=1, limit=4
    $region2: #{tpu_custom_call.1} parent=1 // loop_pre_header
      _
    $region3: #{tpu_custom_call.1} parent=1 // loop_header
      %s21 = sphi 0, %s25
      %p22 = scmp.ge.s32.totalorder %s21, 4
      %s28 = sphi 0, %s40
      %s29 = sphi 0, %s36
      %s30 = sphi 0, %s28
      %s31 = sphi 0, %s29
      %s32 = sphi 0, %s30
      %s33 = sphi 0, %s31
      %s43 = sphi 0, %s45
      %s46 = sphi 0, %s43
      %s47 = sphi 0, %s46
      %s63 = sphi 0, %s47
      %s67 = sphi 0, %s67
      %s69 = sphi 0, %s67
      %s70 = sphi 0, %s69
      %s84 = sphi 0, %s70
      %s88 = sphi 0, %s88
      %s90 = sphi 0, %s88
      %s91 = sphi 0, %s90
      %s105 = sphi 0, %s91
      %s109 = sphi 0, %s109
      %s111 = sphi 0, %s109
      %s112 = sphi 0, %s111
      %s126 = sphi 0, %s112
      %s130 = sphi 0, %s130
      %s132 = sphi 0, %s130
      %s133 = sphi 0, %s132
      %s147 = sphi 0, %s133
      %s151 = sphi 0, %s151
      %s153 = sphi 0, %s151
      %s154 = sphi 0, %s153
      %s168 = sphi 0, %s154
      %s172 = sphi 0, %s172
      %s174 = sphi 0, %s172
      %s175 = sphi 0, %s174
      %s189 = sphi 0, %s175
      %s193 = sphi 0, %s193
      %s195 = sphi 0, %s193
      %s196 = sphi 0, %s195
      %s210 = sphi 0, %s196
      %s214 = sphi 0, %s214
      %s216 = sphi 0, %s214
      %s217 = sphi 0, %s216
      %s231 = sphi 0, %s217
      %s235 = sphi 0, %s235
      %s237 = sphi 0, %s235
      %s238 = sphi 0, %s237
      %s252 = sphi 0, %s238
      %s260 = sphi 0, %s262
      %s263 = sphi 0, %s260
      %s264 = sphi 0, %s263
      %s280 = sphi 0, %s264
    $region4: #{tpu_custom_call.1} parent=1 // loop_header_branch
      %24 = sbr.rel (%p22) target = $region8
    $region5: #{tpu_custom_call.1} parent=1 // loop_body
      %s26 = ssub.s32 %s21, 1
      %s27 = ssub.s32 %s21, 2
      %s34 = sadd.s32 1, %s29
      %p35 = scmp.ge.s32.totalorder %s34, 1
      %s36 = scalar_select %p35, 0, %s34
      %s37 = sadd.s32 1, %s28
      %s38 = scalar_select %p35, %s37, %s28
      %p39 = scmp.ge.s32.totalorder %s38, 2
      %s40 = scalar_select %p39, 0, %s38
      %s41 = ssub.s32 %s28, %s40
      %p42 = scmp.eq.s32.totalorder %s41, 0
      %s44 = sadd.s32 %s43, 1
      %s45 = scalar_select %p42, %s43, %s44
      %p48 = pneg %p42
      %p49 = scmp.eq.s32.totalorder %s21, 1
      %p50 = por %p48, %p49
      %p51 = scmp.ne.s32.totalorder %s43, %s46
      %p52 = scmp.eq.s32.totalorder %s21, 0
      %p53 = por %p51, %p52
      %p54 = scmp.ne.s32.totalorder %s43, %s46
      %p55 = scmp.eq.s32.totalorder %s26, 1
      %p56 = por %p54, %p55
      %p57 = scmp.ne.s32.totalorder %s46, %s47
      %p58 = scmp.eq.s32.totalorder %s26, 0
      %p59 = por %p57, %p58
      %p60 = scmp.ne.s32.totalorder %s46, %s47
      %p61 = scmp.eq.s32.totalorder %s27, 1
      %p62 = por %p60, %p61
      %p64 = scmp.ne.s32.totalorder %s47, %s63
      %p65 = scmp.eq.s32.totalorder %s27, 0
      %p66 = por %p64, %p65
      %s68 = sadd.s32 %s67, 1
      %p71 = scmp.eq.s32.totalorder %s21, 1
      %p72 = scmp.ne.s32.totalorder %s67, %s69
      %p73 = scmp.eq.s32.totalorder %s21, 0
      %p74 = por %p72, %p73
      %p75 = scmp.ne.s32.totalorder %s67, %s69
      %p76 = scmp.eq.s32.totalorder %s26, 1
      %p77 = por %p75, %p76
      %p78 = scmp.ne.s32.totalorder %s69, %s70
      %p79 = scmp.eq.s32.totalorder %s26, 0
      %p80 = por %p78, %p79
      %p81 = scmp.ne.s32.totalorder %s69, %s70
      %p82 = scmp.eq.s32.totalorder %s27, 1
      %p83 = por %p81, %p82
      %p85 = scmp.ne.s32.totalorder %s70, %s84
      %p86 = scmp.eq.s32.totalorder %s27, 0
      %p87 = por %p85, %p86
      %s89 = sadd.s32 %s88, 1
      %p92 = scmp.eq.s32.totalorder %s21, 1
      %p93 = scmp.ne.s32.totalorder %s88, %s90
      %p94 = scmp.eq.s32.totalorder %s21, 0
      %p95 = por %p93, %p94
      %p96 = scmp.ne.s32.totalorder %s88, %s90
      %p97 = scmp.eq.s32.totalorder %s26, 1
      %p98 = por %p96, %p97
      %p99 = scmp.ne.s32.totalorder %s90, %s91
      %p100 = scmp.eq.s32.totalorder %s26, 0
      %p101 = por %p99, %p100
      %p102 = scmp.ne.s32.totalorder %s90, %s91
      %p103 = scmp.eq.s32.totalorder %s27, 1
      %p104 = por %p102, %p103
      %p106 = scmp.ne.s32.totalorder %s91, %s105
      %p107 = scmp.eq.s32.totalorder %s27, 0
      %p108 = por %p106, %p107
      %s110 = sadd.s32 %s109, 1
      %p113 = scmp.eq.s32.totalorder %s21, 1
      %p114 = scmp.ne.s32.totalorder %s109, %s111
      %p115 = scmp.eq.s32.totalorder %s21, 0
      %p116 = por %p114, %p115
      %p117 = scmp.ne.s32.totalorder %s109, %s111
      %p118 = scmp.eq.s32.totalorder %s26, 1
      %p119 = por %p117, %p118
      %p120 = scmp.ne.s32.totalorder %s111, %s112
      %p121 = scmp.eq.s32.totalorder %s26, 0
      %p122 = por %p120, %p121
      %p123 = scmp.ne.s32.totalorder %s111, %s112
      %p124 = scmp.eq.s32.totalorder %s27, 1
      %p125 = por %p123, %p124
      %p127 = scmp.ne.s32.totalorder %s112, %s126
      %p128 = scmp.eq.s32.totalorder %s27, 0
      %p129 = por %p127, %p128
      %s131 = sadd.s32 %s130, 1
      %p134 = scmp.eq.s32.totalorder %s21, 1
      %p135 = scmp.ne.s32.totalorder %s130, %s132
      %p136 = scmp.eq.s32.totalorder %s21, 0
      %p137 = por %p135, %p136
      %p138 = scmp.ne.s32.totalorder %s130, %s132
      %p139 = scmp.eq.s32.totalorder %s26, 1
      %p140 = por %p138, %p139
      %p141 = scmp.ne.s32.totalorder %s132, %s133
      %p142 = scmp.eq.s32.totalorder %s26, 0
      %p143 = por %p141, %p142
      %p144 = scmp.ne.s32.totalorder %s132, %s133
      %p145 = scmp.eq.s32.totalorder %s27, 1
      %p146 = por %p144, %p145
      %p148 = scmp.ne.s32.totalorder %s133, %s147
      %p149 = scmp.eq.s32.totalorder %s27, 0
      %p150 = por %p148, %p149
      %s152 = sadd.s32 %s151, 1
      %p155 = scmp.eq.s32.totalorder %s21, 1
      %p156 = scmp.ne.s32.totalorder %s151, %s153
      %p157 = scmp.eq.s32.totalorder %s21, 0
      %p158 = por %p156, %p157
      %p159 = scmp.ne.s32.totalorder %s151, %s153
      %p160 = scmp.eq.s32.totalorder %s26, 1
      %p161 = por %p159, %p160
      %p162 = scmp.ne.s32.totalorder %s153, %s154
      %p163 = scmp.eq.s32.totalorder %s26, 0
      %p164 = por %p162, %p163
      %p165 = scmp.ne.s32.totalorder %s153, %s154
      %p166 = scmp.eq.s32.totalorder %s27, 1
      %p167 = por %p165, %p166
      %p169 = scmp.ne.s32.totalorder %s154, %s168
      %p170 = scmp.eq.s32.totalorder %s27, 0
      %p171 = por %p169, %p170
      %s173 = sadd.s32 %s172, 1
      %p176 = scmp.eq.s32.totalorder %s21, 1
      %p177 = scmp.ne.s32.totalorder %s172, %s174
      %p178 = scmp.eq.s32.totalorder %s21, 0
      %p179 = por %p177, %p178
      %p180 = scmp.ne.s32.totalorder %s172, %s174
      %p181 = scmp.eq.s32.totalorder %s26, 1
      %p182 = por %p180, %p181
      %p183 = scmp.ne.s32.totalorder %s174, %s175
      %p184 = scmp.eq.s32.totalorder %s26, 0
      %p185 = por %p183, %p184
      %p186 = scmp.ne.s32.totalorder %s174, %s175
      %p187 = scmp.eq.s32.totalorder %s27, 1
      %p188 = por %p186, %p187
      %p190 = scmp.ne.s32.totalorder %s175, %s189
      %p191 = scmp.eq.s32.totalorder %s27, 0
      %p192 = por %p190, %p191
      %s194 = sadd.s32 %s193, 1
      %p197 = scmp.eq.s32.totalorder %s21, 1
      %p198 = scmp.ne.s32.totalorder %s193, %s195
      %p199 = scmp.eq.s32.totalorder %s21, 0
      %p200 = por %p198, %p199
      %p201 = scmp.ne.s32.totalorder %s193, %s195
      %p202 = scmp.eq.s32.totalorder %s26, 1
      %p203 = por %p201, %p202
      %p204 = scmp.ne.s32.totalorder %s195, %s196
      %p205 = scmp.eq.s32.totalorder %s26, 0
      %p206 = por %p204, %p205
      %p207 = scmp.ne.s32.totalorder %s195, %s196
      %p208 = scmp.eq.s32.totalorder %s27, 1
      %p209 = por %p207, %p208
      %p211 = scmp.ne.s32.totalorder %s196, %s210
      %p212 = scmp.eq.s32.totalorder %s27, 0
      %p213 = por %p211, %p212
      %s215 = sadd.s32 %s214, 1
      %p218 = scmp.eq.s32.totalorder %s21, 1
      %p219 = scmp.ne.s32.totalorder %s214, %s216
      %p220 = scmp.eq.s32.totalorder %s21, 0
      %p221 = por %p219, %p220
      %p222 = scmp.ne.s32.totalorder %s214, %s216
      %p223 = scmp.eq.s32.totalorder %s26, 1
      %p224 = por %p222, %p223
      %p225 = scmp.ne.s32.totalorder %s216, %s217
      %p226 = scmp.eq.s32.totalorder %s26, 0
      %p227 = por %p225, %p226
      %p228 = scmp.ne.s32.totalorder %s216, %s217
      %p229 = scmp.eq.s32.totalorder %s27, 1
      %p230 = por %p228, %p229
      %p232 = scmp.ne.s32.totalorder %s217, %s231
      %p233 = scmp.eq.s32.totalorder %s27, 0
      %p234 = por %p232, %p233
      %s236 = sadd.s32 %s235, 1
      %p239 = scmp.eq.s32.totalorder %s21, 1
      %p240 = scmp.ne.s32.totalorder %s235, %s237
      %p241 = scmp.eq.s32.totalorder %s21, 0
      %p242 = por %p240, %p241
      %p243 = scmp.ne.s32.totalorder %s235, %s237
      %p244 = scmp.eq.s32.totalorder %s26, 1
      %p245 = por %p243, %p244
      %p246 = scmp.ne.s32.totalorder %s237, %s238
      %p247 = scmp.eq.s32.totalorder %s26, 0
      %p248 = por %p246, %p247
      %p249 = scmp.ne.s32.totalorder %s237, %s238
      %p250 = scmp.eq.s32.totalorder %s27, 1
      %p251 = por %p249, %p250
      %p253 = scmp.ne.s32.totalorder %s238, %s252
      %p254 = scmp.eq.s32.totalorder %s27, 0
      %p255 = por %p253, %p254
      %s256 = ssub.s32 %s28, %s40
      %s257 = ssub.s32 %s29, %s36
      %s258 = sor.u32 %s256, %s257
      %p259 = scmp.eq.s32.totalorder %s258, 0
      %s261 = sadd.s32 %s260, 1
      %s262 = scalar_select %p259, %s260, %s261
      %p265 = pneg %p259
      %p266 = scmp.eq.s32.totalorder %s21, 1
      %p267 = por %p265, %p266
      %p268 = scmp.ne.s32.totalorder %s260, %s263
      %p269 = scmp.eq.s32.totalorder %s21, 0
      %p270 = por %p268, %p269
      %p271 = scmp.ne.s32.totalorder %s260, %s263
      %p272 = scmp.eq.s32.totalorder %s26, 1
      %p273 = por %p271, %p272
      %p274 = scmp.ne.s32.totalorder %s263, %s264
      %p275 = scmp.eq.s32.totalorder %s26, 0
      %p276 = por %p274, %p275
      %p277 = scmp.ne.s32.totalorder %s263, %s264
      %p278 = scmp.eq.s32.totalorder %s27, 1
      %p279 = por %p277, %p278
      %p281 = scmp.ne.s32.totalorder %s264, %s280
      %p282 = scmp.eq.s32.totalorder %s27, 0
      %p283 = por %p281, %p282
      %p284 = scmp.le.s32.totalorder 1, %s21
      %p285 = scmp.lt.s32.totalorder %s21, 3
      %p286 = pnand %p284, %p285
      %p287 = pneg %p286
      // Predicated region
      $region9: #{tpu_custom_call.1} parent=5 // pred_check
        _
      $region10: #{tpu_custom_call.1} parent=5 // pred_check_branch
        %289 = sbr.rel (%p286) target = $region12
      $region11: #{tpu_custom_call.1} parent=5 // pred_region
        %s290 = ssub.s32 %s21, 1
        // Predicated region
        $region13: #{tpu_custom_call.1} parent=11 // pred_check
          %p291 = pneg %p80
        $region14: #{tpu_custom_call.1} parent=11 // pred_check_branch
          %293 = sbr.rel (%p291) target = $region16
        $region15: #{tpu_custom_call.1} parent=11 // pred_region
          _
        $region16: #{tpu_custom_call.1} parent=11 // pred_fallthru
          _
        // Predicated region
        $region17: #{tpu_custom_call.1} parent=11 // pred_check
          %p294 = pneg %p101
        $region18: #{tpu_custom_call.1} parent=11 // pred_check_branch
          %296 = sbr.rel (%p294) target = $region20
        $region19: #{tpu_custom_call.1} parent=11 // pred_region
          _
        $region20: #{tpu_custom_call.1} parent=11 // pred_fallthru
          _
        // Predicated region
        $region21: #{tpu_custom_call.1} parent=11 // pred_check
          %p297 = pneg %p122
        $region22: #{tpu_custom_call.1} parent=11 // pred_check_branch
          %299 = sbr.rel (%p297) target = $region24
        $region23: #{tpu_custom_call.1} parent=11 // pred_region
          _
        $region24: #{tpu_custom_call.1} parent=11 // pred_fallthru
          _
        // Predicated region
        $region25: #{tpu_custom_call.1} parent=11 // pred_check
          %p300 = pneg %p143
        $region26: #{tpu_custom_call.1} parent=11 // pred_check_branch
          %302 = sbr.rel (%p300) target = $region28
        $region27: #{tpu_custom_call.1} parent=11 // pred_region
          _
        $region28: #{tpu_custom_call.1} parent=11 // pred_fallthru
          _
        // Predicated region
        $region29: #{tpu_custom_call.1} parent=11 // pred_check
          %p303 = pneg %p164
        $region30: #{tpu_custom_call.1} parent=11 // pred_check_branch
          %305 = sbr.rel (%p303) target = $region32
        $region31: #{tpu_custom_call.1} parent=11 // pred_region
          _
        $region32: #{tpu_custom_call.1} parent=11 // pred_fallthru
          _
        // Predicated region
        $region33: #{tpu_custom_call.1} parent=11 // pred_check
          %p306 = pneg %p185
        $region34: #{tpu_custom_call.1} parent=11 // pred_check_branch
          %308 = sbr.rel (%p306) target = $region36
        $region35: #{tpu_custom_call.1} parent=11 // pred_region
          _
        $region36: #{tpu_custom_call.1} parent=11 // pred_fallthru
          _
        // Predicated region
        $region37: #{tpu_custom_call.1} parent=11 // pred_check
          %p309 = pneg %p206
        $region38: #{tpu_custom_call.1} parent=11 // pred_check_branch
          %311 = sbr.rel (%p309) target = $region40
        $region39: #{tpu_custom_call.1} parent=11 // pred_region
          _
        $region40: #{tpu_custom_call.1} parent=11 // pred_fallthru
          _
        // Predicated region
        $region41: #{tpu_custom_call.1} parent=11 // pred_check
          %p312 = pneg %p227
        $region42: #{tpu_custom_call.1} parent=11 // pred_check_branch
          %314 = sbr.rel (%p312) target = $region44
        $region43: #{tpu_custom_call.1} parent=11 // pred_region
          %s316 = ssub.s32 16, 16
          %317 = vsyncadd [#allocation7], %s316
          %s319 = sshll.u32 %s8, 4
          %s320 = int_to_ptr.vmem [resolvable:$true] %s319
          %322 = dma.vmem_to_smem %s320, 16, [#allocation5], [#allocation7]
        $region44: #{tpu_custom_call.1} parent=11 // pred_fallthru
          _
        // Predicated region
        $region45: #{tpu_custom_call.1} parent=11 // pred_check
          %p323 = pneg %p248
        $region46: #{tpu_custom_call.1} parent=11 // pred_check_branch
          %325 = sbr.rel (%p323) target = $region48
        $region47: #{tpu_custom_call.1} parent=11 // pred_region
          _
        $region48: #{tpu_custom_call.1} parent=11 // pred_fallthru
          _
      $region12: #{tpu_custom_call.1} parent=5 // pred_fallthru
        _
      %p326 = scmp.lt.s32.totalorder %s21, 2
      // Predicated region
      $region49: #{tpu_custom_call.1} parent=5 // pred_check
        %p327 = pneg %p326
      $region50: #{tpu_custom_call.1} parent=5 // pred_check_branch
        %329 = sbr.rel (%p327) target = $region52
      $region51: #{tpu_custom_call.1} parent=5 // pred_region
        // Predicated region
        $region53: #{tpu_custom_call.1} parent=51 // pred_check
          %p330 = pneg %p53
        $region54: #{tpu_custom_call.1} parent=51 // pred_check_branch
          %332 = sbr.rel (%p330) target = $region56
        $region55: #{tpu_custom_call.1} parent=51 // pred_region
          %p333 = scmp.lt.s32.totalorder %s28, 1
          %s334 = scalar_select %p333, %s28, 1
          %s335 = smul.addr %s334, 8
          %s336 = scalar_lea.vmem %s0, %s335
        $region56: #{tpu_custom_call.1} parent=51 // pred_fallthru
          _
      $region52: #{tpu_custom_call.1} parent=5 // pred_fallthru
        _
      %p337 = scmp.le.s32.totalorder 1, %s21
      %p338 = scmp.lt.s32.totalorder %s21, 3
      %p339 = pnand %p337, %p338
      %p340 = pneg %p339
      // Predicated region
      $region57: #{tpu_custom_call.1} parent=5 // pred_check
        _
      $region58: #{tpu_custom_call.1} parent=5 // pred_check_branch
        %342 = sbr.rel (%p339) target = $region60
      $region59: #{tpu_custom_call.1} parent=5 // pred_region
        %s343 = ssub.s32 %s21, 1
        // Predicated region
        $region61: #{tpu_custom_call.1} parent=59 // pred_check
          %p344 = pneg %p227
        $region62: #{tpu_custom_call.1} parent=59 // pred_check_branch
          %346 = sbr.rel (%p344) target = $region64
        $region63: #{tpu_custom_call.1} parent=59 // pred_region
          %347 = dma.done [#allocation7], 16
        $region64: #{tpu_custom_call.1} parent=59 // pred_fallthru
          _
        %348 = sfence
        %p349 = scmp.lt.s32.totalorder %s30, 1
        %s350 = scalar_select %p349, %s30, 1
        %s351 = smul.addr %s350, 8
        %s352 = scalar_lea.vmem %s0, %s351
        %p353 = pneg %p59
        %p354 = pneg %p56
        %p355 = pneg %p80
        %p356 = pneg %p77
        %p357 = pneg %p101
        %p358 = pneg %p98
        %p359 = pneg %p122
        %p360 = pneg %p119
        %p361 = pneg %p143
        %p362 = pneg %p140
        %p363 = pneg %p164
        %p364 = pneg %p161
        %p365 = pneg %p185
        %p366 = pneg %p182
        %p367 = pneg %p206
        %p368 = pneg %p203
        %p369 = pneg %p227
        %p370 = pneg %p224
        %p371 = pneg %p248
        %p372 = pneg %p245
        %p373 = pneg %p276
        %p374 = pneg %p273
        %s375 = sand.u32 %s263, 1
        %s376 = scalar_lea.sflag [#allocation6], %s375
        %s377 = sand.u32 %s263, 1
        %s378 = smul.addr %s377, 8
        %s379 = scalar_lea.vmem [#allocation8], %s378
        %p380 = scmp.lt.s32.totalorder %s30, 1
        %s381 = scalar_select %p380, %s30, 1
        %s382 = smul.addr %s381, 8
        %s383 = scalar_lea.vmem %s0, %s382
        %p384 = scmp.eq.s32.totalorder %s31, 0
        // Predicated region
        $region65: #{tpu_custom_call.1} parent=59 // pred_check
          %p385 = pneg %p384
        $region66: #{tpu_custom_call.1} parent=59 // pred_check_branch
          %387 = sbr.rel (%p385) target = $region68
        $region67: #{tpu_custom_call.1} parent=59 // pred_region
          %v388 = vld [vmem:[%s383] sm:$0xff]
          %v389 = vld [vmem:[%s1] sm:$0xff]
          %v390 = vld [vmem:[%s1 + $0x8] sm:$0xff]
          %v391 = vld [vmem:[%s1 + $0x10] sm:$0xff]
          %v392 = vld [vmem:[%s1 + $0x18] sm:$0xff]
          %v393 = vld [vmem:[%s2] sm:$0x1]
          %v395 = vlaneseq
          %v396 = vshrl.u32 %v395, 7
          %v397 = vsub.s32 0, %v396
          %v398 = vrot.slane %v393, %v397
          %vm400 = vcmask 261120
          %v402 = vsel %vm400, %v388, 0
          %404 = vmatprep.subr.mxu0 0.0
          %405 = vmatpush1.msra.mxu0 %v389
          %406 = vmatprep.subr.mxu0 0.0
          %407 = vmatpush1.msra.mxu0 %v390
          %408 = vmatprep.subr.mxu0 0.0
          %409 = vmatpush1.msra.mxu0 %v391
          %410 = vmatprep.subr.mxu0 0.0
          %411 = vmatpush1.msra.mxu0 %v392
          %412 = vmatprep.subr.mxu0 0.0
          %413 = vmatpush1.msra.mxu0 0.0
          %414 = vmatprep.subr.mxu0 0.0
          %415 = vmatpush1.msra.mxu0 0.0
          %416 = vmatprep.subr.mxu0 0.0
          %417 = vmatpush1.msra.mxu0 0.0
          %418 = vmatprep.subr.mxu0 0.0
          %419 = vmatpush1.msra.mxu0 0.0
          %420 = vmatprep.subr.mxu0 0.0
          %421 = vmatpush1.msra.mxu0 0.0
          %422 = vmatprep.subr.mxu0 0.0
          %423 = vmatpush1.msra.mxu0 0.0
          %424 = vmatprep.subr.mxu0 0.0
          %425 = vmatpush1.msra.mxu0 0.0
          %426 = vmatprep.subr.mxu0 0.0
          %427 = vmatpush1.msra.mxu0 0.0
          %428 = vmatprep.subr.mxu0 0.0
          %429 = vmatpush1.msra.mxu0 0.0
          %430 = vmatprep.subr.mxu0 0.0
          %431 = vmatpush1.msra.mxu0 0.0
          %432 = vmatprep.subr.mxu0 0.0
          %433 = vmatpush1.msra.mxu0 0.0
          %434 = vmatprep.subr.mxu0 0.0
          %435 = vmatpush1.msra.mxu0 0.0
          %436 = vmatprep.subr.mxu0 0.0
          %437 = vmatpush1.msra.mxu0 0.0
          %438 = vmatprep.subr.mxu0 0.0
          %439 = vmatpush1.msra.mxu0 0.0
          %440 = vmatprep.subr.mxu0 0.0
          %441 = vmatpush1.msra.mxu0 0.0
          %442 = vmatprep.subr.mxu0 0.0
          %443 = vmatpush1.msra.mxu0 0.0
          %444 = vmatprep.subr.mxu0 0.0
          %445 = vmatpush1.msra.mxu0 0.0
          %446 = vmatprep.subr.mxu0 0.0
          %447 = vmatpush1.msra.mxu0 0.0
          %448 = vmatprep.subr.mxu0 0.0
          %449 = vmatpush1.msra.mxu0 0.0
          %450 = vmatprep.subr.mxu0 0.0
          %451 = vmatpush1.msra.mxu0 0.0
          %452 = vmatprep.subr.mxu0 0.0
          %453 = vmatpush1.msra.mxu0 0.0
          %454 = vmatprep.subr.mxu0 0.0
          %455 = vmatpush1.msra.mxu0 0.0
          %456 = vmatprep.subr.mxu0 0.0
          %457 = vmatpush1.msra.mxu0 0.0
          %458 = vmatprep.subr.mxu0 0.0
          %459 = vmatpush1.msra.mxu0 0.0
          %460 = vmatprep.subr.mxu0 0.0
          %461 = vmatpush1.msra.mxu0 0.0
          %462 = vmatprep.subr.mxu0 0.0
          %463 = vmatpush1.msra.mxu0 0.0
          %464 = vmatprep.subr.mxu0 0.0
          %465 = vmatpush1.msra.mxu0 0.0
          %466 = vmatprep.subr.mxu0 0.0
          %467 = vmatpush1.msra.mxu0 0.0
          %468 = vmatprep.mubr.f32.mxu0 0.0
          %469 = vmatmul.mubr.f32.gmra.mrb[0].mxu0 %v402
          %v470 = vpop.f32.mrb[0].mxu0
          %v471 = vadd.f32 %v398, %v470
          %v472 = vpop.f32.mrb[0].mxu0
          %473 = vdwg.mxu0
          %v474 = vmax.f32 %v471, 0.0
          %v475 = vld [vmem:[%s3] sm:$0xff]
          %v476 = vld [vmem:[%s3 + $0x8] sm:$0xff]
          %v477 = vld [vmem:[%s4] sm:$0x1]
          %v479 = vlaneseq
          %v480 = vshrl.u32 %v479, 7
          %v481 = vsub.s32 0, %v480
          %v482 = vrot.slane %v477, %v481
          %vm484 = vcmask 130048
          %v486 = vsel %vm484, %v474, 0
          %488 = vmatprep.subr.mxu0 0.0
          %489 = vmatpush1.msra.mxu0 %v475
          %490 = vmatprep.subr.mxu0 0.0
          %491 = vmatpush1.msra.mxu0 %v476
          %492 = vmatprep.subr.mxu0 0.0
          %493 = vmatpush1.msra.mxu0 0.0
          %494 = vmatprep.subr.mxu0 0.0
          %495 = vmatpush1.msra.mxu0 0.0
          %496 = vmatprep.subr.mxu0 0.0
          %497 = vmatpush1.msra.mxu0 0.0
          %498 = vmatprep.subr.mxu0 0.0
          %499 = vmatpush1.msra.mxu0 0.0
          %500 = vmatprep.subr.mxu0 0.0
          %501 = vmatpush1.msra.mxu0 0.0
          %502 = vmatprep.subr.mxu0 0.0
          %503 = vmatpush1.msra.mxu0 0.0
          %504 = vmatprep.subr.mxu0 0.0
          %505 = vmatpush1.msra.mxu0 0.0
          %506 = vmatprep.subr.mxu0 0.0
          %507 = vmatpush1.msra.mxu0 0.0
          %508 = vmatprep.subr.mxu0 0.0
          %509 = vmatpush1.msra.mxu0 0.0
          %510 = vmatprep.subr.mxu0 0.0
          %511 = vmatpush1.msra.mxu0 0.0
          %512 = vmatprep.subr.mxu0 0.0
          %513 = vmatpush1.msra.mxu0 0.0
          %514 = vmatprep.subr.mxu0 0.0
          %515 = vmatpush1.msra.mxu0 0.0
          %516 = vmatprep.subr.mxu0 0.0
          %517 = vmatpush1.msra.mxu0 0.0
          %518 = vmatprep.subr.mxu0 0.0
          %519 = vmatpush1.msra.mxu0 0.0
          %520 = vmatprep.subr.mxu0 0.0
          %521 = vmatpush1.msra.mxu0 0.0
          %522 = vmatprep.subr.mxu0 0.0
          %523 = vmatpush1.msra.mxu0 0.0
          %524 = vmatprep.subr.mxu0 0.0
          %525 = vmatpush1.msra.mxu0 0.0
          %526 = vmatprep.subr.mxu0 0.0
          %527 = vmatpush1.msra.mxu0 0.0
          %528 = vmatprep.subr.mxu0 0.0
          %529 = vmatpush1.msra.mxu0 0.0
          %530 = vmatprep.subr.mxu0 0.0
          %531 = vmatpush1.msra.mxu0 0.0
          %532 = vmatprep.subr.mxu0 0.0
          %533 = vmatpush1.msra.mxu0 0.0
          %534 = vmatprep.subr.mxu0 0.0
          %535 = vmatpush1.msra.mxu0 0.0
          %536 = vmatprep.subr.mxu0 0.0
          %537 = vmatpush1.msra.mxu0 0.0
          %538 = vmatprep.subr.mxu0 0.0
          %539 = vmatpush1.msra.mxu0 0.0
          %540 = vmatprep.subr.mxu0 0.0
          %541 = vmatpush1.msra.mxu0 0.0
          %542 = vmatprep.subr.mxu0 0.0
          %543 = vmatpush1.msra.mxu0 0.0
          %544 = vmatprep.subr.mxu0 0.0
          %545 = vmatpush1.msra.mxu0 0.0
          %546 = vmatprep.subr.mxu0 0.0
          %547 = vmatpush1.msra.mxu0 0.0
          %548 = vmatprep.subr.mxu0 0.0
          %549 = vmatpush1.msra.mxu0 0.0
          %550 = vmatprep.subr.mxu0 0.0
          %551 = vmatpush1.msra.mxu0 0.0
          %552 = vmatprep.mubr.f32.mxu0 0.0
          %553 = vmatmul.mubr.f32.gmra.mrb[0].mxu0 %v486
          %v554 = vpop.f32.mrb[0].mxu0
          %v555 = vadd.f32 %v482, %v554
          %v556 = vpop.f32.mrb[0].mxu0
          %557 = vdwg.mxu0
          %v558 = vxor.u32 %v555, 2147483648
          %v559 = vmul.f32 %v558, 1.442695
          %v560 = vpow.pop %v559
          %v561 = vadd.f32 %v560, 1.0
          %v562 = vrcp.pop %v561
          %v563 = vmul.f32 1.0, %v562
          %v564 = vld [vmem:[%s5] sm:$0xff]
          %vm565 = vcmask 64512
          %v567 = vsel %vm565, %v563, 0
          %569 = vmatprep.subr.mxu0 0.0
          %570 = vmatpush1.msra.mxu0 %v564
          %571 = vmatprep.subr.mxu0 0.0
          %572 = vmatpush1.msra.mxu0 0.0
          %573 = vmatprep.subr.mxu0 0.0
          %574 = vmatpush1.msra.mxu0 0.0
          %575 = vmatprep.subr.mxu0 0.0
          %576 = vmatpush1.msra.mxu0 0.0
          %577 = vmatprep.subr.mxu0 0.0
          %578 = vmatpush1.msra.mxu0 0.0
          %579 = vmatprep.subr.mxu0 0.0
          %580 = vmatpush1.msra.mxu0 0.0
          %581 = vmatprep.subr.mxu0 0.0
          %582 = vmatpush1.msra.mxu0 0.0
          %583 = vmatprep.subr.mxu0 0.0
          %584 = vmatpush1.msra.mxu0 0.0
          %585 = vmatprep.subr.mxu0 0.0
          %586 = vmatpush1.msra.mxu0 0.0
          %587 = vmatprep.subr.mxu0 0.0
          %588 = vmatpush1.msra.mxu0 0.0
          %589 = vmatprep.subr.mxu0 0.0
          %590 = vmatpush1.msra.mxu0 0.0
          %591 = vmatprep.subr.mxu0 0.0
          %592 = vmatpush1.msra.mxu0 0.0
          %593 = vmatprep.subr.mxu0 0.0
          %594 = vmatpush1.msra.mxu0 0.0
          %595 = vmatprep.subr.mxu0 0.0
          %596 = vmatpush1.msra.mxu0 0.0
          %597 = vmatprep.subr.mxu0 0.0
          %598 = vmatpush1.msra.mxu0 0.0
          %599 = vmatprep.subr.mxu0 0.0
          %600 = vmatpush1.msra.mxu0 0.0
          %601 = vmatprep.subr.mxu0 0.0
          %602 = vmatpush1.msra.mxu0 0.0
          %603 = vmatprep.subr.mxu0 0.0
          %604 = vmatpush1.msra.mxu0 0.0
          %605 = vmatprep.subr.mxu0 0.0
          %606 = vmatpush1.msra.mxu0 0.0
          %607 = vmatprep.subr.mxu0 0.0
          %608 = vmatpush1.msra.mxu0 0.0
          %609 = vmatprep.subr.mxu0 0.0
          %610 = vmatpush1.msra.mxu0 0.0
          %611 = vmatprep.subr.mxu0 0.0
          %612 = vmatpush1.msra.mxu0 0.0
          %613 = vmatprep.subr.mxu0 0.0
          %614 = vmatpush1.msra.mxu0 0.0
          %615 = vmatprep.subr.mxu0 0.0
          %616 = vmatpush1.msra.mxu0 0.0
          %617 = vmatprep.subr.mxu0 0.0
          %618 = vmatpush1.msra.mxu0 0.0
          %619 = vmatprep.subr.mxu0 0.0
          %620 = vmatpush1.msra.mxu0 0.0
          %621 = vmatprep.subr.mxu0 0.0
          %622 = vmatpush1.msra.mxu0 0.0
          %623 = vmatprep.subr.mxu0 0.0
          %624 = vmatpush1.msra.mxu0 0.0
          %625 = vmatprep.subr.mxu0 0.0
          %626 = vmatpush1.msra.mxu0 0.0
          %627 = vmatprep.subr.mxu0 0.0
          %628 = vmatpush1.msra.mxu0 0.0
          %629 = vmatprep.subr.mxu0 0.0
          %630 = vmatpush1.msra.mxu0 0.0
          %631 = vmatprep.subr.mxu0 0.0
          %632 = vmatpush1.msra.mxu0 0.0
          %633 = vmatprep.mubr.f32.mxu0 0.0
          %634 = vmatmul.mubr.f32.gmra.mrb[0].mxu0 %v567
          %v635 = vpop.f32.mrb[0].mxu0
          %v636 = vadd.f32 0.0, %v635
          %v637 = vpop.f32.mrb[0].mxu0
          %638 = vdwg.mxu0
          %639 = vst.msk [vmem:[#allocation2] sm:$0xff] %vm565, %v636
          %v640 = vld [vmem:[%s6] sm:$0xff]
          %v641 = vld [vmem:[%s7] sm:$0xff]
          %643 = vset.pattern.permute.xlu0 0
          %644 = vperm.xlu0 %643, %v641
          %v645 = vpop.permute.xlu0 %644
          %v648 = vsel %vm565, %v640, 0
          %650 = vmatprep.subr.mxu0 0.0
          %651 = vmatpush1.xpose.msra.mxu0 %v567
          %652 = vmatprep.subr.mxu0 0.0
          %653 = vmatpush1.xpose.msra.mxu0 0.0
          %654 = vmatprep.subr.mxu0 0.0
          %655 = vmatpush1.xpose.msra.mxu0 0.0
          %656 = vmatprep.subr.mxu0 0.0
          %657 = vmatpush1.xpose.msra.mxu0 0.0
          %658 = vmatprep.subr.mxu0 0.0
          %659 = vmatpush1.xpose.msra.mxu0 0.0
          %660 = vmatprep.subr.mxu0 0.0
          %661 = vmatpush1.xpose.msra.mxu0 0.0
          %662 = vmatprep.subr.mxu0 0.0
          %663 = vmatpush1.xpose.msra.mxu0 0.0
          %664 = vmatprep.subr.mxu0 0.0
          %665 = vmatpush1.xpose.msra.mxu0 0.0
          %666 = vmatprep.subr.mxu0 0.0
          %667 = vmatpush1.xpose.msra.mxu0 0.0
          %668 = vmatprep.subr.mxu0 0.0
          %669 = vmatpush1.xpose.msra.mxu0 0.0
          %670 = vmatprep.subr.mxu0 0.0
          %671 = vmatpush1.xpose.msra.mxu0 0.0
          %672 = vmatprep.subr.mxu0 0.0
          %673 = vmatpush1.xpose.msra.mxu0 0.0
          %674 = vmatprep.subr.mxu0 0.0
          %675 = vmatpush1.xpose.msra.mxu0 0.0
          %676 = vmatprep.subr.mxu0 0.0
          %677 = vmatpush1.xpose.msra.mxu0 0.0
          %678 = vmatprep.subr.mxu0 0.0
          %679 = vmatpush1.xpose.msra.mxu0 0.0
          %680 = vmatprep.subr.mxu0 0.0
          %681 = vmatpush1.xpose.msra.mxu0 0.0
          %682 = vmatprep.subr.mxu0 0.0
          %683 = vmatpush1.xpose.msra.mxu0 0.0
          %684 = vmatprep.subr.mxu0 0.0
          %685 = vmatpush1.xpose.msra.mxu0 0.0
          %686 = vmatprep.subr.mxu0 0.0
          %687 = vmatpush1.xpose.msra.mxu0 0.0
          %688 = vmatprep.subr.mxu0 0.0
          %689 = vmatpush1.xpose.msra.mxu0 0.0
          %690 = vmatprep.subr.mxu0 0.0
          %691 = vmatpush1.xpose.msra.mxu0 0.0
          %692 = vmatprep.subr.mxu0 0.0
          %693 = vmatpush1.xpose.msra.mxu0 0.0
          %694 = vmatprep.subr.mxu0 0.0
          %695 = vmatpush1.xpose.msra.mxu0 0.0
          %696 = vmatprep.subr.mxu0 0.0
          %697 = vmatpush1.xpose.msra.mxu0 0.0
          %698 = vmatprep.subr.mxu0 0.0
          %699 = vmatpush1.xpose.msra.mxu0 0.0
          %700 = vmatprep.subr.mxu0 0.0
          %701 = vmatpush1.xpose.msra.mxu0 0.0
          %702 = vmatprep.subr.mxu0 0.0
          %703 = vmatpush1.xpose.msra.mxu0 0.0
          %704 = vmatprep.subr.mxu0 0.0
          %705 = vmatpush1.xpose.msra.mxu0 0.0
          %706 = vmatprep.subr.mxu0 0.0
          %707 = vmatpush1.xpose.msra.mxu0 0.0
          %708 = vmatprep.subr.mxu0 0.0
          %709 = vmatpush1.xpose.msra.mxu0 0.0
          %710 = vmatprep.subr.mxu0 0.0
          %711 = vmatpush1.xpose.msra.mxu0 0.0
          %712 = vmatprep.subr.mxu0 0.0
          %713 = vmatpush1.xpose.msra.mxu0 0.0
          %714 = vmatprep.mubr.f32.mxu0 0.0
          %715 = vmatmul.mubr.f32.gmra.mrb[0].mxu0 %v648
          %v716 = vpop.f32.mrb[0].mxu0
          %v717 = vadd.f32 %v645, %v716
          %v718 = vpop.f32.mrb[0].mxu0
          %719 = vdwg.mxu0
          %720 = vst [vmem:[#allocation3] sm:$0xff] 0.0
          %721 = vst.msk [vmem:[#allocation3] sm:$0xff] %vm565, %v717
        $region68: #{tpu_custom_call.1} parent=59 // pred_fallthru
          _
        %s722 = smul.u32 %s31, 8
        %s723 = scalar_lea.vmem [#allocation2], %s722
        %v724 = vld [vmem:[%s723] sm:$0xff]
        %v725 = vld [vmem:[#allocation3] sm:$0xff]
        %727 = vset.pattern.permute.xlu0 0
        %728 = vperm.xlu0 %727, %v724
        %v729 = vpop.permute.xlu0 %728
        %v731 = vlaneseq
        %v732 = vshrl.u32 %v731, 7
        %v733 = vsub.s32 0, %v732
        %v734 = vrot.slane %v725, %v733
        %v735 = vadd.f32 %v729, %v734
        %v736 = vmax.f32 %v735, 0.0
        %s737 = sld [smem:[#allocation5]]
        %v738 = vstv %s737
        %v739 = vmul.f32 %v738, %v736
        %v740 = vadd.f32 %v739, 0.0
        %741 = vset.pattern.permute.xlu0 1
        %742 = vperm.xlu0 %741, %v724
        %v743 = vpop.permute.xlu0 %742
        %v745 = vlaneseq
        %v746 = vshrl.u32 %v745, 7
        %v747 = vsub.s32 1, %v746
        %v748 = vrot.slane %v725, %v747
        %v749 = vadd.f32 %v743, %v748
        %v750 = vmax.f32 %v749, 0.0
        %s751 = sld [smem:[#allocation5 + $0x1]]
        %v752 = vstv %s751
        %v753 = vmul.f32 %v752, %v750
        %v754 = vadd.f32 %v740, %v753
        %755 = vset.pattern.permute.xlu0 2
        %756 = vperm.xlu0 %755, %v724
        %v757 = vpop.permute.xlu0 %756
        %v759 = vlaneseq
        %v760 = vshrl.u32 %v759, 7
        %v761 = vsub.s32 2, %v760
        %v762 = vrot.slane %v725, %v761
        %v763 = vadd.f32 %v757, %v762
        %v764 = vmax.f32 %v763, 0.0
        %s765 = sld [smem:[#allocation5 + $0x2]]
        %v766 = vstv %s765
        %v767 = vmul.f32 %v766, %v764
        %v768 = vadd.f32 %v754, %v767
        %769 = vset.pattern.permute.xlu0 3
        %770 = vperm.xlu0 %769, %v724
        %v771 = vpop.permute.xlu0 %770
        %v773 = vlaneseq
        %v774 = vshrl.u32 %v773, 7
        %v775 = vsub.s32 3, %v774
        %v776 = vrot.slane %v725, %v775
        %v777 = vadd.f32 %v771, %v776
        %v778 = vmax.f32 %v777, 0.0
        %s779 = sld [smem:[#allocation5 + $0x3]]
        %v780 = vstv %s779
        %v781 = vmul.f32 %v780, %v778
        %v782 = vadd.f32 %v768, %v781
        %783 = vset.pattern.permute.xlu0 4
        %784 = vperm.xlu0 %783, %v724
        %v785 = vpop.permute.xlu0 %784
        %v787 = vlaneseq
        %v788 = vshrl.u32 %v787, 7
        %v789 = vsub.s32 4, %v788
        %v790 = vrot.slane %v725, %v789
        %v791 = vadd.f32 %v785, %v790
        %v792 = vmax.f32 %v791, 0.0
        %s793 = sld [smem:[#allocation5 + $0x4]]
        %v794 = vstv %s793
        %v795 = vmul.f32 %v794, %v792
        %v796 = vadd.f32 %v782, %v795
        %797 = vset.pattern.permute.xlu0 5
        %798 = vperm.xlu0 %797, %v724
        %v799 = vpop.permute.xlu0 %798
        %v801 = vlaneseq
        %v802 = vshrl.u32 %v801, 7
        %v803 = vsub.s32 5, %v802
        %v804 = vrot.slane %v725, %v803
        %v805 = vadd.f32 %v799, %v804
        %v806 = vmax.f32 %v805, 0.0
        %s807 = sld [smem:[#allocation5 + $0x5]]
        %v808 = vstv %s807
        %v809 = vmul.f32 %v808, %v806
        %v810 = vadd.f32 %v796, %v809
        %811 = vset.pattern.permute.xlu0 6
        %812 = vperm.xlu0 %811, %v724
        %v813 = vpop.permute.xlu0 %812
        %v815 = vlaneseq
        %v816 = vshrl.u32 %v815, 7
        %v817 = vsub.s32 6, %v816
        %v818 = vrot.slane %v725, %v817
        %v819 = vadd.f32 %v813, %v818
        %v820 = vmax.f32 %v819, 0.0
        %s821 = sld [smem:[#allocation5 + $0x6]]
        %v822 = vstv %s821
        %v823 = vmul.f32 %v822, %v820
        %v824 = vadd.f32 %v810, %v823
        %825 = vset.pattern.permute.xlu0 7
        %826 = vperm.xlu0 %825, %v724
        %v827 = vpop.permute.xlu0 %826
        %v829 = vlaneseq
        %v830 = vshrl.u32 %v829, 7
        %v831 = vsub.s32 7, %v830
        %v832 = vrot.slane %v725, %v831
        %v833 = vadd.f32 %v827, %v832
        %v834 = vmax.f32 %v833, 0.0
        %s835 = sld [smem:[#allocation5 + $0x7]]
        %v836 = vstv %s835
        %v837 = vmul.f32 %v836, %v834
        %v838 = vadd.f32 %v824, %v837
        %s839 = sld [smem:[#allocation4]]
        %v840 = vstv %s839
        %v841 = vadd.f32 %v838, %v840
        %v842 = vxor.u32 %v841, 2147483648
        %v843 = vmul.f32 %v842, 1.442695
        %v844 = vpow.pop %v843
        %v845 = vadd.f32 %v844, 1.0
        %v846 = vrcp.pop %v845
        %v847 = vmul.f32 1.0, %v846
        %848 = vst [vmem:[%s379] sm:$0xff] %v847
        %s849 = sand.u32 %s263, 1
        %s850 = scalar_lea.sflag [#allocation6], %s849
        %s851 = sand.u32 %s263, 1
        %s852 = smul.addr %s851, 8
        %s853 = scalar_lea.vmem [#allocation8], %s852
        // Predicated region
        $region69: #{tpu_custom_call.1} parent=59 // pred_check
          %p854 = pneg %p273
        $region70: #{tpu_custom_call.1} parent=59 // pred_check_branch
          %856 = sbr.rel (%p854) target = $region72
        $region71: #{tpu_custom_call.1} parent=59 // pred_region
          %s858 = ssub.s32 128, 128
          %859 = vsyncadd %s850, %s858
          %s860 = sadd.s32 %s31, %s30
          %s861 = smul.addr %s860, 128
          %s862 = scalar_lea.hbm %s10, %s861
          %s864 = sshll.u32 %s853, 4
          %s865 = int_to_ptr.vmem [resolvable:$true] %s864
          %867 = dma.vmem_to_hbm [thread:$0]  %s865, 128, %s862, %s850
        $region72: #{tpu_custom_call.1} parent=59 // pred_fallthru
          _
      $region60: #{tpu_custom_call.1} parent=5 // pred_fallthru
        _
      %p868 = scmp.le.s32.totalorder 2, %s21
      // Predicated region
      $region73: #{tpu_custom_call.1} parent=5 // pred_check
        %p869 = pneg %p868
      $region74: #{tpu_custom_call.1} parent=5 // pred_check_branch
        %871 = sbr.rel (%p869) target = $region76
      $region75: #{tpu_custom_call.1} parent=5 // pred_region
        %s872 = ssub.s32 %s21, 2
        // Predicated region
        $region77: #{tpu_custom_call.1} parent=75 // pred_check
          %p873 = pneg %p279
        $region78: #{tpu_custom_call.1} parent=75 // pred_check_branch
          %875 = sbr.rel (%p873) target = $region80
        $region79: #{tpu_custom_call.1} parent=75 // pred_region
          %s876 = sand.u32 %s264, 1
          %s877 = scalar_lea.sflag [#allocation6], %s876
          %s878 = sand.u32 %s264, 1
          %s879 = smul.addr %s878, 8
          %s880 = scalar_lea.vmem [#allocation8], %s879
          %881 = dma.done %s877, 128
        $region80: #{tpu_custom_call.1} parent=75 // pred_fallthru
          _
      $region76: #{tpu_custom_call.1} parent=5 // pred_fallthru
        _
    $region6: #{tpu_custom_call.1} parent=1 // loop_footer
      %s25 = sadd.s32 1, %s21
    $region7: #{tpu_custom_call.1} parent=1 // loop_footer_branch
      %20 = sbr.rel target = $region3
    $region8: #{tpu_custom_call.1} parent=1 // loop_exit
      _
    %882 = vsyncpa [#allocation6], 1
    %s883 = scalar_lea.sflag [#allocation6], 1
    %884 = vsyncpa %s883, 1
    %885 = vsyncpa [#allocation7], 1
    %s886 = scalar_lea.sflag [#allocation7], 1
    %887 = vsyncpa %s886, 1

</llo_original>
